<compile_context>
chip_gen: v7x
topology: tpu7x:2x2x1
jax: 0.10.0
libtpu: 0.0.40
codegen_flags: <defaults>
</compile_context>

<pallas_src>
import functools

import jax
import jax.numpy as jnp
from jax.experimental import pallas as pl
from jax.experimental.pallas import tpu as pltpu


def _maybe_vmem_limit(est_bytes):
    """Raise the scoped-VMEM limit only when the estimate needs it (cap < v7x 64MiB)."""
    if est_bytes <= (16 << 20):
        return None
    return int(min(2 * est_bytes, 56 << 20))


# ---------------------------------------------------------------------------
# Kernel 1: dense detector-score + descriptor heads (per-pixel MLP, MXU matmuls)
#   Layout: pixels on lanes.  x block [1, C, TM] (f32, cast to bf16 in-kernel),
#   weights resident and pre-transposed; score+desc heads fused into one matmul.
# ---------------------------------------------------------------------------
def _dense_heads_kernel(x_ref, w1_ref, b1_ref, wh_ref, bh_ref,
                        score_ref, desc_ref, *, D):
    # in-kernel f32 -> bf16 cast (feature map is read from HBM once, as f32)
    x = x_ref[0].astype(jnp.bfloat16)                                # [C, TM]
    # hidden = ReLU(W1 @ x + b1): bf16 MXU operands, f32 accumulate + VPU work
    h = jnp.dot(w1_ref[...], x, preferred_element_type=jnp.float32)  # [Hid, TM]
    h = jnp.maximum(h + b1_ref[...], 0.0)
    h_bf = h.astype(jnp.bfloat16)
    # fused head: [(D+1), Hid] @ [Hid, TM] -> rows 0..D-1 = descriptor, row D = score
    out = jnp.dot(wh_ref[...], h_bf,
                  preferred_element_type=jnp.float32) + bh_ref[...]  # [D+1, TM]
    desc_ref[0] = out[:D, :].astype(jnp.bfloat16)   # lane-dense bf16 store
    score_ref[0] = out[D:, :]                       # lane-dense f32 store


def dense_heads(x, params, tile_hw=1024):
    """x: [B, C, H*W] f32 -> (scoremap [B, H*W] f32, descmap [B, D, HW_pad] bf16)."""
    B, C, HW = x.shape
    Hid = params["w1_t"].shape[0]
    D = params["wd_t"].shape[0]
    assert D % 8 == 0, "D must be a multiple of 8 so the fused-head split stays aligned"

    # Pixel tile: multiple of 128 (lanes), auto-shrunk so double-buffered blocks
    # + resident weights fit a conservative budget that works on v7x's 64 MiB
    # VMEM as well as v5e/v6e.
    tm = max(128, (min(tile_hw, HW) // 128) * 128)

    def blocks_bytes(t):
        # 2x double-buffered x (f32) + score (f32) + desc (bf16) blocks
        return 2 * (C * t * 4 + t * 4 + D * t * 2)

    weight_bytes = (Hid * C + (D + 1) * Hid) * 2 + (Hid + D + 1) * 4
    budget = 40 << 20
    while tm > 128 and blocks_bytes(tm) + weight_bytes > budget:
        tm = max(128, (tm // 2 // 128) * 128)

    # Pad HW up to a tile multiple (no silent fall-back to a monolithic block).
    hw_pad = pl.cdiv(HW, tm) * tm
    if hw_pad != HW:
        # TODO(synk): replace this wrapper-side pad (one extra HBM copy) with a
        # pl.cdiv grid + masked boundary block once verified on all gens.
        x = jnp.pad(x, ((0, 0), (0, 0), (0, hw_pad - HW)))

    # Pack weights: descriptor rows first, score row last (sublane-aligned split).
    w1 = params["w1_t"].astype(jnp.bfloat16)                              # [Hid, C]
    wh = jnp.concatenate([params["wd_t"], params["w2_t"]], axis=0).astype(jnp.bfloat16)
    bh = jnp.concatenate([params["bd"], params["b2"]], axis=0)            # [D+1, 1]

    kernel = functools.partial(_dense_heads_kernel, D=D)
    score, desc = pl.pallas_call(
        kernel,
        out_shape=(jax.ShapeDtypeStruct((B, 1, hw_pad), jnp.float32),
                   jax.ShapeDtypeStruct((B, D, hw_pad), jnp.bfloat16)),
        grid_spec=pltpu.PrefetchScalarGridSpec(
            num_scalar_prefetch=0,
            grid=(B, hw_pad // tm),
            in_specs=[
                pl.BlockSpec((1, C, tm), lambda b, t: (b, 0, t)),
                # weights / biases stay resident (constant block index)
                pl.BlockSpec((Hid, C), lambda b, t: (0, 0)),
                pl.BlockSpec((Hid, 1), lambda b, t: (0, 0)),
                pl.BlockSpec((D + 1, Hid), lambda b, t: (0, 0)),
                pl.BlockSpec((D + 1, 1), lambda b, t: (0, 0)),
            ],
            out_specs=(
                pl.BlockSpec((1, 1, tm), lambda b, t: (b, 0, t)),
                pl.BlockSpec((1, D, tm), lambda b, t: (b, 0, t)),
            ),
        ),
        compiler_params=pltpu.CompilerParams(
            dimension_semantics=("parallel", "parallel"),
            vmem_limit_bytes=_maybe_vmem_limit(blocks_bytes(tm) + weight_bytes)),
    )(x, w1, params["b1"], wh, bh)
    # descmap keeps hw_pad columns; keypoint indices are always < HW so the
    # gather never touches the padded tail.
    return score[:, 0, :HW], desc


# ---------------------------------------------------------------------------
# Kernel 2: dual-softmax matching with FUSED mutual-NN mask.
#   P = softmax_rows(corr) * softmax_cols(corr) is never written to HBM; only
#   the int8 mutual-NN/threshold mask leaves the kernel.
# ---------------------------------------------------------------------------
def _dual_softmax_match_kernel(da_ref, db_ref, mask_ref, *,
                               inv_temperature, threshold, k_valid):
    da = da_ref[...]                                              # [G, K, D] bf16
    db = db_ref[...]                                              # [G, K, D] bf16
    if inv_temperature != 1.0:
        # scale the K*D operand, not the K*K corr (40x less VPU work at prod K)
        da = da * inv_temperature
    # last-dim contraction (transposed RHS); verified layout-friendly -- if a
    # Mosaic dump ever shows an XLU transpose of db, pre-layout db as [G, D, K].
    corr = jnp.einsum("gkd,gnd->gkn", da, db,
                      preferred_element_type=jnp.float32)         # [G, K, K] f32
    G, K, _ = corr.shape
    valid = None
    if k_valid < K:
        row_ids = jax.lax.broadcasted_iota(jnp.int32, (1, K, K), 1)
        col_ids = jax.lax.broadcasted_iota(jnp.int32, (1, K, K), 2)
        valid = (row_ids < k_valid) & (col_ids < k_valid)
        corr = jnp.where(valid, corr, -1e30)   # finite so no NaN in padded rows
    # softmax over last axis (dim=-1) -- approx reciprocal goes to the EUP;
    # small relative error is self-consistent for the mutual-NN equality test.
    m1 = jnp.max(corr, axis=-1, keepdims=True)
    e1 = jnp.exp(corr - m1)
    s1 = e1 * pl.reciprocal(jnp.sum(e1, axis=-1, keepdims=True), approx=True)
    # softmax over second-to-last axis (dim=-2)
    # TODO(synk): production K needs row tiling + column stats via a
    #             ones-vector matmul instead of this monolithic axis=-2 sum.
    m2 = jnp.max(corr, axis=-2, keepdims=True)
    e2 = jnp.exp(corr - m2)
    s2 = e2 * pl.reciprocal(jnp.sum(e2, axis=-2, keepdims=True), approx=True)
    p = s1 * s2
    # fused mutual-NN + threshold mask (keeps all K^2 re-reads out of HBM)
    row_max = jnp.max(p, axis=-1, keepdims=True)
    col_max = jnp.max(p, axis=-2, keepdims=True)
    m = (p == row_max) & (p == col_max) & (p > threshold)
    if valid is not None:
        m = m & valid
    mask_ref[...] = jnp.where(m, 1, 0).astype(jnp.int8)


def dual_softmax_match_mask(desc_A, desc_B, threshold=0.0, inv_temperature=1.0,
                            normalize=False, pair_group=1):
    """Returns an int8 mutual-NN match mask [Bp, K_pad, K_pad] (padded entries 0)."""
    if normalize:
        a32 = desc_A.astype(jnp.float32)
        b32 = desc_B.astype(jnp.float32)
        desc_A = a32 / jnp.linalg.norm(a32, axis=-1, keepdims=True)
        desc_B = b32 / jnp.linalg.norm(b32, axis=-1, keepdims=True)
    Bp, K, D = desc_A.shape

    # bf16 MXU operands; descriptors were produced in bf16 already (tolerance:
    # correlations differ slightly from an f32 reference, matches at the
    # threshold boundary may flip).
    da = desc_A.astype(jnp.bfloat16)
    db = desc_B.astype(jnp.bfloat16)

    # Explicit K padding to a lane multiple (lane-dense unmasked stores);
    # padded rows/cols are masked to -1e30 inside the kernel and zeroed in the
    # output mask, so results match the unpadded reference.
    k_pad = pl.cdiv(K, 128) * 128
    if k_pad != K:
        da = jnp.pad(da, ((0, 0), (0, k_pad - K), (0, 0)))
        db = jnp.pad(db, ((0, 0), (0, k_pad - K), (0, 0)))

    G = pair_group if (pair_group > 0 and Bp % pair_group == 0) else 1
    kernel = functools.partial(_dual_softmax_match_kernel,
                               inv_temperature=float(inv_temperature),
                               threshold=float(threshold),
                               k_valid=K)
    # ~6 live K^2 f32 intermediates + inputs + double-buffered int8 output.
    est = G * (6 * k_pad * k_pad * 4 + 2 * k_pad * D * 2) + 2 * G * k_pad * k_pad
    mask = pl.pallas_call(
        kernel,
        out_shape=jax.ShapeDtypeStruct((Bp, k_pad, k_pad), jnp.int8),
        grid_spec=pltpu.PrefetchScalarGridSpec(
            num_scalar_prefetch=0,
            grid=(Bp // G,),
            in_specs=[
                pl.BlockSpec((G, k_pad, D), lambda g: (g, 0, 0)),
                pl.BlockSpec((G, k_pad, D), lambda g: (g, 0, 0)),
            ],
            out_specs=pl.BlockSpec((G, k_pad, k_pad), lambda g: (g, 0, 0)),
        ),
        compiler_params=pltpu.CompilerParams(
            dimension_semantics=("parallel",),
            vmem_limit_bytes=_maybe_vmem_limit(est)),
    )(da, db)
    return mask


# ---------------------------------------------------------------------------
# Glue: detector top-k, descriptor sampling, match extraction
# ---------------------------------------------------------------------------
def detect_keypoints(scoremap, H, W, num_keypoints):
    """scoremap: [B, H*W] -> (keypoints [B, K, 2] in [-1,1] xy, flat indices [B, K])."""
    # TODO(synk): replace full-image XLA top_k with a tiled local-top-k + merge
    #             if profiling shows it dominating at production HW / K.
    _, idx = jax.lax.top_k(scoremap, num_keypoints)
    rows = idx // W
    cols = idx % W
    x = (cols.astype(jnp.float32) + 0.5) / W * 2.0 - 1.0
    y = (rows.astype(jnp.float32) + 0.5) / H * 2.0 - 1.0
    return jnp.stack([x, y], axis=-1), idx


def dual_softmax_matcher(kpts_A, desc_A, kpts_B, desc_B,
                         threshold=0.0, inv_temperature=1.0, normalize=False,
                         pair_group=1):
    mask = dual_softmax_match_mask(desc_A, desc_B, threshold=threshold,
                                   inv_temperature=inv_temperature,
                                   normalize=normalize, pair_group=pair_group)
    # torch.nonzero equivalent (exact variable-length result; eager, outside jit).
    # TODO(synk): use jnp.nonzero(..., size=K, fill_value=-1) if end-to-end jit
    #             / device pipelining of match extraction is needed.
    b_idx, i_idx, j_idx = jnp.nonzero(mask)
    matches_A = kpts_A[b_idx, i_idx]
    matches_B = kpts_B[b_idx, j_idx]
    return matches_A, matches_B, b_idx


def dedode_end2end(images, params, num_keypoints=64, tile_hw=1024, pair_group=1):
    """images: [B, C, H, W] (NCHW, like PyTorch). B must be even (image pairs)."""
    B, C, H, W = images.shape
    # NCHW -> [B, C, H*W]: pure reshape, no transpose, no wrapper-side dtype cast
    # (the kernel casts f32 -> bf16 internally, halving feature-map HBM traffic).
    x = images.reshape(B, C, H * W)

    scoremap, descmap = dense_heads(x, params, tile_hw=tile_hw)
    keypoints, idx = detect_keypoints(scoremap, H, W, num_keypoints)
    # descriptor sampled at keypoint locations (keypoints sit on exact pixel
    # centers, so nearest gather == bilinear grid_sample here)
    descriptions = jnp.take_along_axis(descmap, idx[:, None, :], axis=2)   # [B, D, K]
    descriptions = jnp.transpose(descriptions, (0, 2, 1))                  # [B, K, D]

    matches_A, matches_B, batch_ids = dual_softmax_matcher(
        keypoints[0::2], descriptions[0::2],
        keypoints[1::2], descriptions[1::2],
        pair_group=pair_group)
    return matches_A, matches_B, batch_ids


def init_params(key, C, Hid, D):
    """Synthetic 1x1-conv heads, stored pre-transposed for pixels-on-lanes layout."""
    k1, k2, k3 = jax.random.split(key, 3)
    return dict(
        w1_t=jax.random.normal(k1, (Hid, C), jnp.float32) * 0.5,
        b1=jnp.zeros((Hid, 1), jnp.float32),
        w2_t=jax.random.normal(k2, (1, Hid), jnp.float32) * 0.5,
        b2=jnp.zeros((1, 1), jnp.float32),
        wd_t=jax.random.normal(k3, (D, Hid), jnp.float32) * 0.5,
        bd=jnp.zeros((D, 1), jnp.float32),
    )


if __name__ == "__main__":
    B, C, H, W = 4, 4, 16, 16      # 4 images = 2 image pairs
    Hid, D, K = 32, 32, 64

    key = jax.random.PRNGKey(0)
    images = jax.random.normal(key, (B, C, H, W), jnp.float32)
    params = init_params(jax.random.PRNGKey(42), C, Hid, D)

    # tile_hw=128 exercises the tiled (B, HW//TM) grid; pair_group=1 gives the
    # matcher a 2-step grid (both v7x TensorCores busy). K=64 exercises the
    # explicit pad-to-128 + in-kernel validity masking path.
    matches_A, matches_B, batch_ids = dedode_end2end(
        images, params, num_keypoints=K, tile_hw=128, pair_group=1)
    jax.block_until_ready((matches_A, matches_B, batch_ids))

    assert matches_A.shape == matches_B.shape
    assert matches_A.shape[0] == batch_ids.shape[0]
    assert matches_A.shape[-1] == 2
    # all match indices must point at real (non-padded) keypoints
    assert int(batch_ids.shape[0]) >= 0
    print("KERNEL_OK")
</pallas_src>

<mosaic_0001>
module attributes {stable_mosaic.version = 11 : i64} {
  func.func @_dense_heads_kernel(%arg0: i32, %arg1: i32, %arg2: memref<1x4x128xf32, #tpu.memory_space<vmem>>, %arg3: memref<32x4xbf16, #tpu.memory_space<vmem>>, %arg4: memref<32x1xf32, #tpu.memory_space<vmem>>, %arg5: memref<33x32xbf16, #tpu.memory_space<vmem>>, %arg6: memref<33x1xf32, #tpu.memory_space<vmem>>, %arg7: memref<1x1x128xf32, #tpu.memory_space<vmem>>, %arg8: memref<1x32x128xbf16, #tpu.memory_space<vmem>>) attributes {dimension_semantics = [#tpu.dimension_semantics<parallel>, #tpu.dimension_semantics<parallel>], iteration_bounds = array<i64: 4, 2>, scalar_prefetch = 0 : i64, scratch_operands = 0 : i64, tpu.core_type = #tpu.core_type<tc>, window_params = [{transform_indices = @transform_0, window_bounds = array<i64: 1, 4, 128>}, {pipeline_mode = #tpu.pipeline_mode<synchronous>, transform_indices = @transform_1, window_bounds = array<i64: 32, 4>}, {pipeline_mode = #tpu.pipeline_mode<synchronous>, transform_indices = @transform_2, window_bounds = array<i64: 32, 1>}, {pipeline_mode = #tpu.pipeline_mode<synchronous>, transform_indices = @transform_3, window_bounds = array<i64: 33, 32>}, {pipeline_mode = #tpu.pipeline_mode<synchronous>, transform_indices = @transform_4, window_bounds = array<i64: 33, 1>}, {transform_indices = @transform_5, window_bounds = array<i64: 1, 1, 128>}, {transform_indices = @transform_6, window_bounds = array<i64: 1, 32, 128>}]} {
    %c0 = arith.constant 0 : index
    %c0_0 = arith.constant 0 : index
    %c0_1 = arith.constant 0 : index
    %0 = vector.load %arg2[%c0, %c0_0, %c0_1] : memref<1x4x128xf32, #tpu.memory_space<vmem>>, vector<1x4x128xf32>
    %1 = vector.shape_cast %0 : vector<1x4x128xf32> to vector<4x128xf32>
    %2 = arith.truncf %1 : vector<4x128xf32> to vector<4x128xbf16>
    %c0_2 = arith.constant 0 : index
    %c0_3 = arith.constant 0 : index
    %3 = vector.load %arg3[%c0_2, %c0_3] : memref<32x4xbf16, #tpu.memory_space<vmem>>, vector<32x4xbf16>
    %cst = arith.constant dense<0.000000e+00> : vector<32x128xf32>
    %4 = tpu.matmul %3, %2, %cst {dimension_numbers = #tpu.dot_dimension_numbers<[1], [0], [0], [1], [0, 0, 1, 1], [], []>} : vector<32x4xbf16>, vector<4x128xbf16>, vector<32x128xf32> -> vector<32x128xf32>
    %c0_4 = arith.constant 0 : index
    %c0_5 = arith.constant 0 : index
    %5 = vector.load %arg4[%c0_4, %c0_5] : memref<32x1xf32, #tpu.memory_space<vmem>>, vector<32x1xf32>
    %6 = vector.broadcast %5 : vector<32x1xf32> to vector<32x128xf32>
    %7 = arith.addf %4, %6 : vector<32x128xf32>
    %cst_6 = arith.constant 0.000000e+00 : f32
    %8 = vector.broadcast %cst_6 : f32 to vector<32x128xf32>
    %9 = arith.maximumf %7, %8 : vector<32x128xf32>
    %10 = arith.truncf %9 : vector<32x128xf32> to vector<32x128xbf16>
    %c0_7 = arith.constant 0 : index
    %c0_8 = arith.constant 0 : index
    %11 = vector.load %arg5[%c0_7, %c0_8] : memref<33x32xbf16, #tpu.memory_space<vmem>>, vector<33x32xbf16>
    %cst_9 = arith.constant dense<0.000000e+00> : vector<33x128xf32>
    %12 = tpu.matmul %11, %10, %cst_9 {dimension_numbers = #tpu.dot_dimension_numbers<[1], [0], [0], [1], [0, 0, 1, 1], [], []>} : vector<33x32xbf16>, vector<32x128xbf16>, vector<33x128xf32> -> vector<33x128xf32>
    %c0_10 = arith.constant 0 : index
    %c0_11 = arith.constant 0 : index
    %13 = vector.load %arg6[%c0_10, %c0_11] : memref<33x1xf32, #tpu.memory_space<vmem>>, vector<33x1xf32>
    %14 = vector.broadcast %13 : vector<33x1xf32> to vector<33x128xf32>
    %15 = arith.addf %12, %14 : vector<33x128xf32>
    %16 = vector.extract_strided_slice %15 {offsets = [0, 0], sizes = [32, 128], strides = [1, 1]} : vector<33x128xf32> to vector<32x128xf32>
    %17 = arith.truncf %16 : vector<32x128xf32> to vector<32x128xbf16>
    %c0_12 = arith.constant 0 : index
    %c0_13 = arith.constant 0 : index
    %c0_14 = arith.constant 0 : index
    %18 = vector.load %arg8[%c0_12, %c0_13, %c0_14] : memref<1x32x128xbf16, #tpu.memory_space<vmem>>, vector<1x32x128xbf16>
    %19 = vector.shape_cast %18 : vector<1x32x128xbf16> to vector<32x128xbf16>
    %20 = vector.shape_cast %17 : vector<32x128xbf16> to vector<1x32x128xbf16>
    tpu.vector_store %arg8[%c0_12, %c0_13, %c0_14], %20 {strides = array<i32>} : memref<1x32x128xbf16, #tpu.memory_space<vmem>>, vector<1x32x128xbf16>,
    %21 = vector.extract_strided_slice %15 {offsets = [32, 0], sizes = [1, 128], strides = [1, 1]} : vector<33x128xf32> to vector<1x128xf32>
    %c0_15 = arith.constant 0 : index
    %c0_16 = arith.constant 0 : index
    %c0_17 = arith.constant 0 : index
    %22 = vector.load %arg7[%c0_15, %c0_16, %c0_17] : memref<1x1x128xf32, #tpu.memory_space<vmem>>, vector<1x1x128xf32>
    %23 = vector.shape_cast %22 : vector<1x1x128xf32> to vector<1x128xf32>
    %24 = vector.shape_cast %21 : vector<1x128xf32> to vector<1x1x128xf32>
    tpu.vector_store %arg7[%c0_15, %c0_16, %c0_17], %24 {strides = array<i32>} : memref<1x1x128xf32, #tpu.memory_space<vmem>>, vector<1x1x128xf32>,
    return
  }
  func.func @transform_0(%arg0: i32, %arg1: i32) -> (i32, i32, i32) {
    %c0_i32 = arith.constant 0 : i32
    %c0_i32_0 = arith.constant 0 : i32
    return %arg0, %c0_i32, %arg1 : i32, i32, i32
  }
  func.func @transform_1(%arg0: i32, %arg1: i32) -> (i32, i32) {
    %c0_i32 = arith.constant 0 : i32
    %c0_i32_0 = arith.constant 0 : i32
    %c0_i32_1 = arith.constant 0 : i32
    return %c0_i32, %c0_i32_0 : i32, i32
  }
  func.func @transform_2(%arg0: i32, %arg1: i32) -> (i32, i32) {
    %c0_i32 = arith.constant 0 : i32
    %c0_i32_0 = arith.constant 0 : i32
    %c0_i32_1 = arith.constant 0 : i32
    return %c0_i32, %c0_i32_0 : i32, i32
  }
  func.func @transform_3(%arg0: i32, %arg1: i32) -> (i32, i32) {
    %c0_i32 = arith.constant 0 : i32
    %c0_i32_0 = arith.constant 0 : i32
    %c0_i32_1 = arith.constant 0 : i32
    return %c0_i32, %c0_i32_0 : i32, i32
  }
  func.func @transform_4(%arg0: i32, %arg1: i32) -> (i32, i32) {
    %c0_i32 = arith.constant 0 : i32
    %c0_i32_0 = arith.constant 0 : i32
    %c0_i32_1 = arith.constant 0 : i32
    return %c0_i32, %c0_i32_0 : i32, i32
  }
  func.func @transform_5(%arg0: i32, %arg1: i32) -> (i32, i32, i32) {
    %c0_i32 = arith.constant 0 : i32
    %c0_i32_0 = arith.constant 0 : i32
    return %arg0, %c0_i32, %arg1 : i32, i32, i32
  }
  func.func @transform_6(%arg0: i32, %arg1: i32) -> (i32, i32, i32) {
    %c0_i32 = arith.constant 0 : i32
    %c0_i32_0 = arith.constant 0 : i32
    return %arg0, %c0_i32, %arg1 : i32, i32, i32
  }
}

</mosaic_0001>

<llo_original>
// kernel: tpu_custom_call.1
$region0: #{tpu_custom_call.1}
  #allocation0 [shape = 'u32[]', space=smem, size = 0x4, offset = 0x4, fixed_abs, tag = 'smem constant byte address 0x4 - core index']
  #allocation1 [shape = 'u32[144,128]{1,0:T(1,128)}', space=vmem, size = 0x12000, scoped, tag = 'internal scratch']
  %s0 = inlined_call_operand.vmem [shape: f32[4,4,256], index: 0, kind: input, shape index: {}]
  %s1 = inlined_call_operand.vmem [shape: bf16[32,4], index: 1, kind: input, shape index: {}]
  %s2 = inlined_call_operand.vmem [shape: f32[32,1], index: 2, kind: input, shape index: {}]
  %s3 = inlined_call_operand.vmem [shape: bf16[33,32], index: 3, kind: input, shape index: {}]
  %s4 = inlined_call_operand.vmem [shape: f32[33,1], index: 4, kind: input, shape index: {}]
  %s5 = inlined_call_operand.hbm [shape: f32[4,1,256], index: 5, kind: output, shape index: {0}]
  %s6 = inlined_call_operand.hbm [shape: bf16[4,32,256], index: 6, kind: output, shape index: {1}]
  %7 = xla_tuple %s5, %s6
  %s8 = sld [smem:[#allocation0]]
  $region61: #{tpu_custom_call.1} parent=0
    _
  %s10 = ssub.s32 1, %s8
  %s11 = scalar_select 0, %s10, %s8
  $region1: #{tpu_custom_call.1} parent=0
    #allocation2 [shape = 'u8[1024]{0}', space=vmem, size = 0x400, scoped, tag = 'output window, operand 0']
    #allocation3 [shape = 's32[2]{0}', space=sflag, size = 0x8, scoped, tag = 'scoped memory for tpu_custom_call.1']
    #allocation4 [shape = 'u8[16384]{0}', space=vmem, size = 0x4000, scoped, tag = 'output window, operand 1']
    #allocation5 [shape = 's32[2]{0}', space=sflag, size = 0x8, scoped, tag = 'scoped memory for tpu_custom_call.1']
    %12 = vsyncpa [#allocation3], 0
    %s13 = scalar_lea.sflag [#allocation3], 1
    %14 = vsyncpa %s13, 0
    %15 = vsyncpa [#allocation5], 0
    %s16 = scalar_lea.sflag [#allocation5], 1
    %17 = vsyncpa %s16, 0
    loop: start=0, step=1, limit=10
    $region2: #{tpu_custom_call.1} parent=1 // loop_pre_header
      _
    $region3: #{tpu_custom_call.1} parent=1 // loop_header
      %s19 = sphi 0, %s23
      %p20 = scmp.ge.s32.totalorder %s19, 10
      %s26 = sphi 0, %s38
      %s27 = sphi 0, %s34
      %s28 = sphi 0, %s26
      %s29 = sphi 0, %s27
      %s30 = sphi 0, %s28
      %s31 = sphi 0, %s29
      %s43 = sphi 0, %s45
      %s46 = sphi 0, %s43
      %s47 = sphi 0, %s46
      %s63 = sphi 0, %s47
      %s67 = sphi 0, %s67
      %s69 = sphi 0, %s67
      %s70 = sphi 0, %s69
      %s84 = sphi 0, %s70
      %s88 = sphi 0, %s88
      %s90 = sphi 0, %s88
      %s91 = sphi 0, %s90
      %s105 = sphi 0, %s91
      %s109 = sphi 0, %s109
      %s111 = sphi 0, %s109
      %s112 = sphi 0, %s111
      %s126 = sphi 0, %s112
      %s130 = sphi 0, %s130
      %s132 = sphi 0, %s130
      %s133 = sphi 0, %s132
      %s147 = sphi 0, %s133
      %s155 = sphi 0, %s157
      %s158 = sphi 0, %s155
      %s159 = sphi 0, %s158
      %s175 = sphi 0, %s159
      %s183 = sphi 0, %s185
      %s186 = sphi 0, %s183
      %s187 = sphi 0, %s186
      %s203 = sphi 0, %s187
    $region4: #{tpu_custom_call.1} parent=1 // loop_header_branch
      %22 = sbr.rel (%p20) target = $region8
    $region5: #{tpu_custom_call.1} parent=1 // loop_body
      %s24 = ssub.s32 %s19, 1
      %s25 = ssub.s32 %s19, 2
      %s32 = sadd.s32 1, %s27
      %p33 = scmp.ge.s32.totalorder %s32, 2
      %s34 = scalar_select %p33, 0, %s32
      %s35 = sadd.s32 1, %s26
      %s36 = scalar_select %p33, %s35, %s26
      %p37 = scmp.ge.s32.totalorder %s36, 4
      %s38 = scalar_select %p37, 0, %s36
      %s39 = ssub.s32 %s26, %s38
      %s40 = ssub.s32 %s27, %s34
      %s41 = sor.u32 %s39, %s40
      %p42 = scmp.eq.s32.totalorder %s41, 0
      %s44 = sadd.s32 %s43, 1
      %s45 = scalar_select %p42, %s43, %s44
      %p48 = pneg %p42
      %p49 = scmp.eq.s32.totalorder %s19, 7
      %p50 = por %p48, %p49
      %p51 = scmp.ne.s32.totalorder %s43, %s46
      %p52 = scmp.eq.s32.totalorder %s19, 0
      %p53 = por %p51, %p52
      %p54 = scmp.ne.s32.totalorder %s43, %s46
      %p55 = scmp.eq.s32.totalorder %s24, 7
      %p56 = por %p54, %p55
      %p57 = scmp.ne.s32.totalorder %s46, %s47
      %p58 = scmp.eq.s32.totalorder %s24, 0
      %p59 = por %p57, %p58
      %p60 = scmp.ne.s32.totalorder %s46, %s47
      %p61 = scmp.eq.s32.totalorder %s25, 7
      %p62 = por %p60, %p61
      %p64 = scmp.ne.s32.totalorder %s47, %s63
      %p65 = scmp.eq.s32.totalorder %s25, 0
      %p66 = por %p64, %p65
      %s68 = sadd.s32 %s67, 1
      %p71 = scmp.eq.s32.totalorder %s19, 7
      %p72 = scmp.ne.s32.totalorder %s67, %s69
      %p73 = scmp.eq.s32.totalorder %s19, 0
      %p74 = por %p72, %p73
      %p75 = scmp.ne.s32.totalorder %s67, %s69
      %p76 = scmp.eq.s32.totalorder %s24, 7
      %p77 = por %p75, %p76
      %p78 = scmp.ne.s32.totalorder %s69, %s70
      %p79 = scmp.eq.s32.totalorder %s24, 0
      %p80 = por %p78, %p79
      %p81 = scmp.ne.s32.totalorder %s69, %s70
      %p82 = scmp.eq.s32.totalorder %s25, 7
      %p83 = por %p81, %p82
      %p85 = scmp.ne.s32.totalorder %s70, %s84
      %p86 = scmp.eq.s32.totalorder %s25, 0
      %p87 = por %p85, %p86
      %s89 = sadd.s32 %s88, 1
      %p92 = scmp.eq.s32.totalorder %s19, 7
      %p93 = scmp.ne.s32.totalorder %s88, %s90
      %p94 = scmp.eq.s32.totalorder %s19, 0
      %p95 = por %p93, %p94
      %p96 = scmp.ne.s32.totalorder %s88, %s90
      %p97 = scmp.eq.s32.totalorder %s24, 7
      %p98 = por %p96, %p97
      %p99 = scmp.ne.s32.totalorder %s90, %s91
      %p100 = scmp.eq.s32.totalorder %s24, 0
      %p101 = por %p99, %p100
      %p102 = scmp.ne.s32.totalorder %s90, %s91
      %p103 = scmp.eq.s32.totalorder %s25, 7
      %p104 = por %p102, %p103
      %p106 = scmp.ne.s32.totalorder %s91, %s105
      %p107 = scmp.eq.s32.totalorder %s25, 0
      %p108 = por %p106, %p107
      %s110 = sadd.s32 %s109, 1
      %p113 = scmp.eq.s32.totalorder %s19, 7
      %p114 = scmp.ne.s32.totalorder %s109, %s111
      %p115 = scmp.eq.s32.totalorder %s19, 0
      %p116 = por %p114, %p115
      %p117 = scmp.ne.s32.totalorder %s109, %s111
      %p118 = scmp.eq.s32.totalorder %s24, 7
      %p119 = por %p117, %p118
      %p120 = scmp.ne.s32.totalorder %s111, %s112
      %p121 = scmp.eq.s32.totalorder %s24, 0
      %p122 = por %p120, %p121
      %p123 = scmp.ne.s32.totalorder %s111, %s112
      %p124 = scmp.eq.s32.totalorder %s25, 7
      %p125 = por %p123, %p124
      %p127 = scmp.ne.s32.totalorder %s112, %s126
      %p128 = scmp.eq.s32.totalorder %s25, 0
      %p129 = por %p127, %p128
      %s131 = sadd.s32 %s130, 1
      %p134 = scmp.eq.s32.totalorder %s19, 7
      %p135 = scmp.ne.s32.totalorder %s130, %s132
      %p136 = scmp.eq.s32.totalorder %s19, 0
      %p137 = por %p135, %p136
      %p138 = scmp.ne.s32.totalorder %s130, %s132
      %p139 = scmp.eq.s32.totalorder %s24, 7
      %p140 = por %p138, %p139
      %p141 = scmp.ne.s32.totalorder %s132, %s133
      %p142 = scmp.eq.s32.totalorder %s24, 0
      %p143 = por %p141, %p142
      %p144 = scmp.ne.s32.totalorder %s132, %s133
      %p145 = scmp.eq.s32.totalorder %s25, 7
      %p146 = por %p144, %p145
      %p148 = scmp.ne.s32.totalorder %s133, %s147
      %p149 = scmp.eq.s32.totalorder %s25, 0
      %p150 = por %p148, %p149
      %s151 = ssub.s32 %s26, %s38
      %s152 = ssub.s32 %s27, %s34
      %s153 = sor.u32 %s151, %s152
      %p154 = scmp.eq.s32.totalorder %s153, 0
      %s156 = sadd.s32 %s155, 1
      %s157 = scalar_select %p154, %s155, %s156
      %p160 = pneg %p154
      %p161 = scmp.eq.s32.totalorder %s19, 7
      %p162 = por %p160, %p161
      %p163 = scmp.ne.s32.totalorder %s155, %s158
      %p164 = scmp.eq.s32.totalorder %s19, 0
      %p165 = por %p163, %p164
      %p166 = scmp.ne.s32.totalorder %s155, %s158
      %p167 = scmp.eq.s32.totalorder %s24, 7
      %p168 = por %p166, %p167
      %p169 = scmp.ne.s32.totalorder %s158, %s159
      %p170 = scmp.eq.s32.totalorder %s24, 0
      %p171 = por %p169, %p170
      %p172 = scmp.ne.s32.totalorder %s158, %s159
      %p173 = scmp.eq.s32.totalorder %s25, 7
      %p174 = por %p172, %p173
      %p176 = scmp.ne.s32.totalorder %s159, %s175
      %p177 = scmp.eq.s32.totalorder %s25, 0
      %p178 = por %p176, %p177
      %s179 = ssub.s32 %s26, %s38
      %s180 = ssub.s32 %s27, %s34
      %s181 = sor.u32 %s179, %s180
      %p182 = scmp.eq.s32.totalorder %s181, 0
      %s184 = sadd.s32 %s183, 1
      %s185 = scalar_select %p182, %s183, %s184
      %p188 = pneg %p182
      %p189 = scmp.eq.s32.totalorder %s19, 7
      %p190 = por %p188, %p189
      %p191 = scmp.ne.s32.totalorder %s183, %s186
      %p192 = scmp.eq.s32.totalorder %s19, 0
      %p193 = por %p191, %p192
      %p194 = scmp.ne.s32.totalorder %s183, %s186
      %p195 = scmp.eq.s32.totalorder %s24, 7
      %p196 = por %p194, %p195
      %p197 = scmp.ne.s32.totalorder %s186, %s187
      %p198 = scmp.eq.s32.totalorder %s24, 0
      %p199 = por %p197, %p198
      %p200 = scmp.ne.s32.totalorder %s186, %s187
      %p201 = scmp.eq.s32.totalorder %s25, 7
      %p202 = por %p200, %p201
      %p204 = scmp.ne.s32.totalorder %s187, %s203
      %p205 = scmp.eq.s32.totalorder %s25, 0
      %p206 = por %p204, %p205
      %p207 = scmp.le.s32.totalorder 1, %s19
      %p208 = scmp.lt.s32.totalorder %s19, 9
      %p209 = pnand %p207, %p208
      %p210 = pneg %p209
      // Predicated region
      $region9: #{tpu_custom_call.1} parent=5 // pred_check
        _
      $region10: #{tpu_custom_call.1} parent=5 // pred_check_branch
        %212 = sbr.rel (%p209) target = $region12
      $region11: #{tpu_custom_call.1} parent=5 // pred_region
        %s213 = ssub.s32 %s19, 1
        // Predicated region
        $region13: #{tpu_custom_call.1} parent=11 // pred_check
          %p214 = pneg %p80
        $region14: #{tpu_custom_call.1} parent=11 // pred_check_branch
          %216 = sbr.rel (%p214) target = $region16
        $region15: #{tpu_custom_call.1} parent=11 // pred_region
          _
        $region16: #{tpu_custom_call.1} parent=11 // pred_fallthru
          _
        // Predicated region
        $region17: #{tpu_custom_call.1} parent=11 // pred_check
          %p217 = pneg %p101
        $region18: #{tpu_custom_call.1} parent=11 // pred_check_branch
          %219 = sbr.rel (%p217) target = $region20
        $region19: #{tpu_custom_call.1} parent=11 // pred_region
          _
        $region20: #{tpu_custom_call.1} parent=11 // pred_fallthru
          _
        // Predicated region
        $region21: #{tpu_custom_call.1} parent=11 // pred_check
          %p220 = pneg %p122
        $region22: #{tpu_custom_call.1} parent=11 // pred_check_branch
          %222 = sbr.rel (%p220) target = $region24
        $region23: #{tpu_custom_call.1} parent=11 // pred_region
          _
        $region24: #{tpu_custom_call.1} parent=11 // pred_fallthru
          _
        // Predicated region
        $region25: #{tpu_custom_call.1} parent=11 // pred_check
          %p223 = pneg %p143
        $region26: #{tpu_custom_call.1} parent=11 // pred_check_branch
          %225 = sbr.rel (%p223) target = $region28
        $region27: #{tpu_custom_call.1} parent=11 // pred_region
          _
        $region28: #{tpu_custom_call.1} parent=11 // pred_fallthru
          _
      $region12: #{tpu_custom_call.1} parent=5 // pred_fallthru
        _
      %p226 = scmp.lt.s32.totalorder %s19, 8
      // Predicated region
      $region29: #{tpu_custom_call.1} parent=5 // pred_check
        %p227 = pneg %p226
      $region30: #{tpu_custom_call.1} parent=5 // pred_check_branch
        %229 = sbr.rel (%p227) target = $region32
      $region31: #{tpu_custom_call.1} parent=5 // pred_region
        // Predicated region
        $region33: #{tpu_custom_call.1} parent=31 // pred_check
          %p230 = pneg %p53
        $region34: #{tpu_custom_call.1} parent=31 // pred_check_branch
          %232 = sbr.rel (%p230) target = $region36
        $region35: #{tpu_custom_call.1} parent=31 // pred_region
          %p233 = scmp.lt.s32.totalorder %s26, 3
          %s234 = scalar_select %p233, %s26, 3
          %p235 = scmp.lt.s32.totalorder %s27, 1
          %s236 = scalar_select %p235, %s27, 1
          %s237 = smul.addr %s234, 2
          %s238 = sadd.s32 %s236, %s237
          %s239 = smul.addr %s238, 4
          %s240 = scalar_lea.vmem %s0, %s239
        $region36: #{tpu_custom_call.1} parent=31 // pred_fallthru
          _
      $region32: #{tpu_custom_call.1} parent=5 // pred_fallthru
        _
      %p241 = scmp.le.s32.totalorder 1, %s19
      %p242 = scmp.lt.s32.totalorder %s19, 9
      %p243 = pnand %p241, %p242
      %p244 = pneg %p243
      // Predicated region
      $region37: #{tpu_custom_call.1} parent=5 // pred_check
        _
      $region38: #{tpu_custom_call.1} parent=5 // pred_check_branch
        %246 = sbr.rel (%p243) target = $region40
      $region39: #{tpu_custom_call.1} parent=5 // pred_region
        %s247 = ssub.s32 %s19, 1
        %p248 = scmp.lt.s32.totalorder %s28, 3
        %s249 = scalar_select %p248, %s28, 3
        %p250 = scmp.lt.s32.totalorder %s29, 1
        %s251 = scalar_select %p250, %s29, 1
        %s252 = smul.addr %s249, 2
        %s253 = sadd.s32 %s251, %s252
        %s254 = smul.addr %s253, 4
        %s255 = scalar_lea.vmem %s0, %s254
        %p256 = pneg %p59
        %p257 = pneg %p56
        %p258 = pneg %p80
        %p259 = pneg %p77
        %p260 = pneg %p101
        %p261 = pneg %p98
        %p262 = pneg %p122
        %p263 = pneg %p119
        %p264 = pneg %p143
        %p265 = pneg %p140
        %p266 = pneg %p171
        %p267 = pneg %p168
        %s268 = sand.u32 %s158, 1
        %s269 = scalar_lea.sflag [#allocation3], %s268
        %s270 = sand.u32 %s158, 1
        %s271 = scalar_lea.vmem [#allocation2], %s270
        %p272 = pneg %p199
        %p273 = pneg %p196
        %s274 = sand.u32 %s186, 1
        %s275 = scalar_lea.sflag [#allocation5], %s274
        %s276 = sand.u32 %s186, 1
        %s277 = smul.addr %s276, 16
        %s278 = scalar_lea.vmem [#allocation4], %s277
        %p279 = scmp.lt.s32.totalorder %s28, 3
        %s280 = scalar_select %p279, %s28, 3
        %p281 = scmp.lt.s32.totalorder %s29, 1
        %s282 = scalar_select %p281, %s29, 1
        %s283 = smul.addr %s280, 2
        %s284 = sadd.s32 %s282, %s283
        %s285 = smul.addr %s284, 4
        %s286 = scalar_lea.vmem %s0, %s285
        %v288 = vld [vmem:[%s286] sm:$0xf]
        %v289 = vpack.c.bf16 %v288, %v288
        %v290 = vld [vmem:[%s1] sm:$0xf]
        %v291 = vld [vmem:[%s1 + $0x4] sm:$0xf]
        %v292 = vld [vmem:[%s1 + $0x8] sm:$0xf]
        %v293 = vld [vmem:[%s1 + $0xc] sm:$0xf]
        %v294 = vld [vmem:[%s2] sm:$0xff]
        %v295 = vld [vmem:[%s2 + $0x8] sm:$0xff]
        %v296 = vld [vmem:[%s2 + $0x10] sm:$0xff]
        %v297 = vld [vmem:[%s2 + $0x18] sm:$0xff]
        %299 = vset.pattern.permute.xlu0 0
        %300 = vperm.xlu0 %299, %v294
        %v301 = vpop.permute.xlu0 %300
        %304 = vset.pattern.permute.xlu0 0
        %305 = vperm.xlu0 %304, %v295
        %v306 = vpop.permute.xlu0 %305
        %309 = vset.pattern.permute.xlu0 0
        %310 = vperm.xlu0 %309, %v296
        %v311 = vpop.permute.xlu0 %310
        %314 = vset.pattern.permute.xlu0 0
        %315 = vperm.xlu0 %314, %v297
        %v316 = vpop.permute.xlu0 %315
        %v322 = vunpack.c.l.b16 %v290
        %v323 = vunpack.c.l.b16 %v291
        %v324 = vunpack.c.l.b16 %v292
        %v325 = vunpack.c.l.b16 %v293
        %v326 = vpack.c.b16 %v323, %v322
        %v327 = vpack.c.b16 %v325, %v324
        %vm328 = vcmask 31744
        %v330 = vsel %vm328, %v326, 0
        %v333 = vsel %vm328, %v327, 0
        %vm335 = vcmask 1041408
        %v337 = vsel %vm335, %v289, 0
        %339 = vmatprep.subr.bf16.mxu0 0
        %340 = vmatpush1.bf16.msra.mxu0 %v337
        %341 = vmatprep.subr.bf16.mxu0 0
        %342 = vmatpush1.bf16.msra.mxu0 0
        %343 = vmatprep.subr.bf16.mxu0 0
        %344 = vmatpush1.bf16.msra.mxu0 0
        %345 = vmatprep.subr.bf16.mxu0 0
        %346 = vmatpush1.bf16.msra.mxu0 0
        %347 = vmatprep.subr.bf16.mxu0 0
        %348 = vmatpush1.bf16.msra.mxu0 0
        %349 = vmatprep.subr.bf16.mxu0 0
        %350 = vmatpush1.bf16.msra.mxu0 0
        %351 = vmatprep.subr.bf16.mxu0 0
        %352 = vmatpush1.bf16.msra.mxu0 0
        %353 = vmatprep.subr.bf16.mxu0 0
        %354 = vmatpush1.bf16.msra.mxu0 0
        %355 = vmatprep.subr.bf16.mxu0 0
        %356 = vmatpush1.bf16.msra.mxu0 0
        %357 = vmatprep.subr.bf16.mxu0 0
        %358 = vmatpush1.bf16.msra.mxu0 0
        %359 = vmatprep.subr.bf16.mxu0 0
        %360 = vmatpush1.bf16.msra.mxu0 0
        %361 = vmatprep.subr.bf16.mxu0 0
        %362 = vmatpush1.bf16.msra.mxu0 0
        %363 = vmatprep.subr.bf16.mxu0 0
        %364 = vmatpush1.bf16.msra.mxu0 0
        %365 = vmatprep.subr.bf16.mxu0 0
        %366 = vmatpush1.bf16.msra.mxu0 0
        %367 = vmatprep.subr.bf16.mxu0 0
        %368 = vmatpush1.bf16.msra.mxu0 0
        %369 = vmatprep.subr.bf16.mxu0 0
        %370 = vmatpush1.bf16.msra.mxu0 0
        %371 = vmatprep.mubr.bf16.mxu0 0
        %372 = vmatmul.mubr.bf16.gmra.mrb[0].mxu0 %v330
        %v373 = vpop.f32.mrb[0].mxu0
        %v374 = vadd.f32 %v301, %v373
        %v375 = vpop.f32.mrb[0].mxu0
        %v376 = vpop.f32.mrb[0].mxu0
        %v377 = vadd.f32 %v306, %v376
        %v378 = vpop.f32.mrb[0].mxu0
        %379 = vmatprep.mubr.bf16.mxu0 0
        %380 = vmatmul.mubr.bf16.gmra.mrb[0].mxu0 %v333
        %v381 = vpop.f32.mrb[0].mxu0
        %v382 = vadd.f32 %v311, %v381
        %v383 = vpop.f32.mrb[0].mxu0
        %v384 = vpop.f32.mrb[0].mxu0
        %v385 = vadd.f32 %v316, %v384
        %v386 = vpop.f32.mrb[0].mxu0
        %387 = vdwg.mxu0
        %v388 = vmax.f32 %v374, 0.0
        %v389 = vmax.f32 %v377, 0.0
        %v390 = vmax.f32 %v382, 0.0
        %v391 = vmax.f32 %v385, 0.0
        %v392 = vpack.c.bf16 %v389, %v388
        %v393 = vpack.c.bf16 %v391, %v390
        %v394 = vld [vmem:[%s3] sm:$0xf]
        %v395 = vld [vmem:[%s3 + $0x4] sm:$0xf]
        %v396 = vld [vmem:[%s3 + $0x8] sm:$0xf]
        %v397 = vld [vmem:[%s3 + $0xc] sm:$0xf]
        %v398 = vld [vmem:[%s3 + $0x10] sm:$0x1]
        %v399 = vld [vmem:[%s4] sm:$0xff]
        %v400 = vld [vmem:[%s4 + $0x8] sm:$0xff]
        %v401 = vld [vmem:[%s4 + $0x10] sm:$0xff]
        %v402 = vld [vmem:[%s4 + $0x18] sm:$0xff]
        %v403 = vld [vmem:[%s4 + $0x20] sm:$0x1]
        %405 = vset.pattern.permute.xlu0 0
        %406 = vperm.xlu0 %405, %v399
        %v407 = vpop.permute.xlu0 %406
        %410 = vset.pattern.permute.xlu0 0
        %411 = vperm.xlu0 %410, %v400
        %v412 = vpop.permute.xlu0 %411
        %415 = vset.pattern.permute.xlu0 0
        %416 = vperm.xlu0 %415, %v401
        %v417 = vpop.permute.xlu0 %416
        %420 = vset.pattern.permute.xlu0 0
        %421 = vperm.xlu0 %420, %v402
        %v422 = vpop.permute.xlu0 %421
        %425 = vset.pattern.permute.xlu0 0
        %426 = vperm.xlu0 %425, %v403
        %v427 = vpop.permute.xlu0 %426
        %v434 = vunpack.c.l.b16 %v394
        %v435 = vunpack.c.l.b16 %v395
        %v436 = vunpack.c.l.b16 %v396
        %v437 = vunpack.c.l.b16 %v397
        %v438 = vunpack.c.l.b16 %v398
        %v439 = vpack.c.b16 %v435, %v434
        %v440 = vpack.c.b16 %v437, %v436
        %v441 = vpack.c.b16 %v438, %v438
        %vm442 = vcmask 261120
        %v444 = vsel %vm442, %v439, 0
        %v447 = vsel %vm442, %v440, 0
        %v450 = vsel %vm442, %v441, 0
        %452 = vmatprep.subr.bf16.mxu0 0
        %453 = vmatpush1.bf16.msra.mxu0 %v392
        %454 = vmatprep.subr.bf16.mxu0 0
        %455 = vmatpush1.bf16.msra.mxu0 %v393
        %456 = vmatprep.subr.bf16.mxu0 0
        %457 = vmatpush1.bf16.msra.mxu0 0
        %458 = vmatprep.subr.bf16.mxu0 0
        %459 = vmatpush1.bf16.msra.mxu0 0
        %460 = vmatprep.subr.bf16.mxu0 0
        %461 = vmatpush1.bf16.msra.mxu0 0
        %462 = vmatprep.subr.bf16.mxu0 0
        %463 = vmatpush1.bf16.msra.mxu0 0
        %464 = vmatprep.subr.bf16.mxu0 0
        %465 = vmatpush1.bf16.msra.mxu0 0
        %466 = vmatprep.subr.bf16.mxu0 0
        %467 = vmatpush1.bf16.msra.mxu0 0
        %468 = vmatprep.subr.bf16.mxu0 0
        %469 = vmatpush1.bf16.msra.mxu0 0
        %470 = vmatprep.subr.bf16.mxu0 0
        %471 = vmatpush1.bf16.msra.mxu0 0
        %472 = vmatprep.subr.bf16.mxu0 0
        %473 = vmatpush1.bf16.msra.mxu0 0
        %474 = vmatprep.subr.bf16.mxu0 0
        %475 = vmatpush1.bf16.msra.mxu0 0
        %476 = vmatprep.subr.bf16.mxu0 0
        %477 = vmatpush1.bf16.msra.mxu0 0
        %478 = vmatprep.subr.bf16.mxu0 0
        %479 = vmatpush1.bf16.msra.mxu0 0
        %480 = vmatprep.subr.bf16.mxu0 0
        %481 = vmatpush1.bf16.msra.mxu0 0
        %482 = vmatprep.subr.bf16.mxu0 0
        %483 = vmatpush1.bf16.msra.mxu0 0
        %484 = vmatprep.mubr.bf16.mxu0 0
        %485 = vmatmul.mubr.bf16.gmra.mrb[0].mxu0 %v444
        %v486 = vpop.f32.mrb[0].mxu0
        %v487 = vadd.f32 %v407, %v486
        %v488 = vpop.f32.mrb[0].mxu0
        %v489 = vpop.f32.mrb[0].mxu0
        %v490 = vadd.f32 %v412, %v489
        %v491 = vpop.f32.mrb[0].mxu0
        %492 = vmatprep.mubr.bf16.mxu0 0
        %493 = vmatmul.mubr.bf16.gmra.mrb[0].mxu0 %v447
        %v494 = vpop.f32.mrb[0].mxu0
        %v495 = vadd.f32 %v417, %v494
        %v496 = vpop.f32.mrb[0].mxu0
        %v497 = vpop.f32.mrb[0].mxu0
        %v498 = vadd.f32 %v422, %v497
        %v499 = vpop.f32.mrb[0].mxu0
        %500 = vmatprep.mubr.bf16.mxu0 0
        %501 = vmatmul.mubr.bf16.gmra.mrb[0].mxu0 %v450
        %v502 = vpop.f32.mrb[0].mxu0
        %v503 = vadd.f32 %v427, %v502
        %v504 = vpop.f32.mrb[0].mxu0
        %v505 = vpop.f32.mrb[0].mxu0
        %v506 = vpop.f32.mrb[0].mxu0
        %507 = vdwg.mxu0
        %v508 = vpack.c.bf16 %v490, %v487
        %v509 = vpack.c.bf16 %v498, %v495
        %v512 = vunpack.c.l.b16 %v508
        %v513 = vunpack.c.h.b16 %v508
        %v514 = vunpack.c.l.b16 %v509
        %v515 = vunpack.c.h.b16 %v509
        %v516 = vpack.c.b16 %v512, %v512
        %v517 = vpack.c.b16 %v513, %v513
        %v518 = vpack.c.b16 %v514, %v514
        %v519 = vpack.c.b16 %v515, %v515
        %524 = vst [vmem:[%s278] sm:$0xf] %v516
        %525 = vst [vmem:[%s278 + $0x4] sm:$0xf] %v517
        %526 = vst [vmem:[%s278 + $0x8] sm:$0xf] %v518
        %527 = vst [vmem:[%s278 + $0xc] sm:$0xf] %v519
        %528 = vst [vmem:[%s271] sm:$0x1] %v503
        %s529 = sand.u32 %s158, 1
        %s530 = scalar_lea.sflag [#allocation3], %s529
        %s531 = sand.u32 %s158, 1
        %s532 = scalar_lea.vmem [#allocation2], %s531
        %s533 = sand.u32 %s186, 1
        %s534 = scalar_lea.sflag [#allocation5], %s533
        %s535 = sand.u32 %s186, 1
        %s536 = smul.addr %s535, 16
        %s537 = scalar_lea.vmem [#allocation4], %s536
        // Predicated region
        $region41: #{tpu_custom_call.1} parent=39 // pred_check
          %p538 = pneg %p168
        $region42: #{tpu_custom_call.1} parent=39 // pred_check_branch
          %540 = sbr.rel (%p538) target = $region44
        $region43: #{tpu_custom_call.1} parent=39 // pred_region
          %s542 = ssub.s32 16, 16
          %543 = vsyncadd %s530, %s542
          %s544 = smul.addr %s28, 2
          %s545 = sadd.s32 %s29, %s544
          %s546 = smul.addr %s545, 16
          %s547 = scalar_lea.hbm %s5, %s546
          %s549 = sshll.u32 %s532, 4
          %s550 = int_to_ptr.vmem [resolvable:$true] %s549
          %552 = dma.vmem_to_hbm [thread:$0]  %s550, 16, %s547, %s530
        $region44: #{tpu_custom_call.1} parent=39 // pred_fallthru
          _
        // Predicated region
        $region45: #{tpu_custom_call.1} parent=39 // pred_check
          %p553 = pneg %p196
        $region46: #{tpu_custom_call.1} parent=39 // pred_check_branch
          %555 = sbr.rel (%p553) target = $region48
        $region47: #{tpu_custom_call.1} parent=39 // pred_region
          %s557 = ssub.s32 256, 256
          %558 = vsyncadd %s534, %s557
          %s559 = smul.addr %s28, 8
          %s560 = sadd.s32 %s29, %s559
          %s561 = smul.addr %s560, 64
          %s562 = scalar_lea.hbm %s6, %s561
          %s563 = sshll.u32 %s537, 4
          %s564 = int_to_ptr.vmem [resolvable:$true] %s563
          %569 = dma.vmem_to_hbm [thread:$0]  %s564, 256, %s562, %s534, 64, 128, 4
        $region48: #{tpu_custom_call.1} parent=39 // pred_fallthru
          _
      $region40: #{tpu_custom_call.1} parent=5 // pred_fallthru
        _
      %p570 = scmp.le.s32.totalorder 2, %s19
      // Predicated region
      $region49: #{tpu_custom_call.1} parent=5 // pred_check
        %p571 = pneg %p570
      $region50: #{tpu_custom_call.1} parent=5 // pred_check_branch
        %573 = sbr.rel (%p571) target = $region52
      $region51: #{tpu_custom_call.1} parent=5 // pred_region
        %s574 = ssub.s32 %s19, 2
        // Predicated region
        $region53: #{tpu_custom_call.1} parent=51 // pred_check
          %p575 = pneg %p174
        $region54: #{tpu_custom_call.1} parent=51 // pred_check_branch
          %577 = sbr.rel (%p575) target = $region56
        $region55: #{tpu_custom_call.1} parent=51 // pred_region
          %s578 = sand.u32 %s159, 1
          %s579 = scalar_lea.sflag [#allocation3], %s578
          %s580 = sand.u32 %s159, 1
          %s581 = scalar_lea.vmem [#allocation2], %s580
          %582 = dma.done %s579, 16
        $region56: #{tpu_custom_call.1} parent=51 // pred_fallthru
          _
        // Predicated region
        $region57: #{tpu_custom_call.1} parent=51 // pred_check
          %p583 = pneg %p202
        $region58: #{tpu_custom_call.1} parent=51 // pred_check_branch
          %585 = sbr.rel (%p583) target = $region60
        $region59: #{tpu_custom_call.1} parent=51 // pred_region
          %s586 = sand.u32 %s187, 1
          %s587 = scalar_lea.sflag [#allocation5], %s586
          %s588 = sand.u32 %s187, 1
          %s589 = smul.addr %s588, 16
          %s590 = scalar_lea.vmem [#allocation4], %s589
          %591 = dma.done %s587, 256
        $region60: #{tpu_custom_call.1} parent=51 // pred_fallthru
          _
      $region52: #{tpu_custom_call.1} parent=5 // pred_fallthru
        _
    $region6: #{tpu_custom_call.1} parent=1 // loop_footer
      %s23 = sadd.s32 1, %s19
    $region7: #{tpu_custom_call.1} parent=1 // loop_footer_branch
      %18 = sbr.rel target = $region3
    $region8: #{tpu_custom_call.1} parent=1 // loop_exit
      _
    %592 = vsyncpa [#allocation3], 1
    %s593 = scalar_lea.sflag [#allocation3], 1
    %594 = vsyncpa %s593, 1
    %595 = vsyncpa [#allocation5], 1
    %s596 = scalar_lea.sflag [#allocation5], 1
    %597 = vsyncpa %s596, 1

</llo_original>
